<compile_context>
chip_gen: v7x
topology: tpu7x:2x2x1
jax: 0.10.0
libtpu: 0.0.40
codegen_flags: <defaults>
</compile_context>

<pallas_src>
import functools

import jax
import jax.numpy as jnp
from jax.experimental import pallas as pl
from jax.experimental.pallas import tpu as pltpu


# ------------------------------ Pallas kernel ------------------------------- #

def graphnet_fused_kernel(a_ref, x_ref, batch_ref,
                          w1_ref, w2_ref, w3_ref, w4_ref, w5_ref,
                          bias_ref, o_ref):
    """Full forward pass; all intermediates stay in VMEM / vregs."""
    bp = bias_ref[...]                                   # (5, C_MAX) f32, BN-folded biases
    a = a_ref[...]                                       # (N, N) bf16 normalized adjacency

    # ---- GCN layer 1 (BN folded): relu(A_hat @ (X @ W1') + b1') ----
    c1 = w1_ref.shape[1]
    xw = jnp.dot(x_ref[...], w1_ref[...], preferred_element_type=jnp.float32)
    h = jnp.dot(a, xw.astype(jnp.bfloat16), preferred_element_type=jnp.float32)
    h = jnp.maximum(h + bp[0:1, :c1], jnp.float32(0.0))

    # ---- GCN layer 2 (BN folded) ----
    c2 = w2_ref.shape[1]
    xw = jnp.dot(h.astype(jnp.bfloat16), w2_ref[...], preferred_element_type=jnp.float32)
    h = jnp.dot(a, xw.astype(jnp.bfloat16), preferred_element_type=jnp.float32)
    h = jnp.maximum(h + bp[1:2, :c2], jnp.float32(0.0))

    # ---- global_max_pool(h, batch) ----
    # h >= 0 after ReLU, so max over (h * mask) == max over the graph's own nodes;
    # the (N, 1) id column keeps the select sublane-aligned (pure VPU, no XLU transpose)
    # and empty graphs pool to exactly 0.
    nb = o_ref.shape[0]                                  # num_graphs (small & static)
    rows = []
    for b in range(nb):
        m = (batch_ref[...] == jnp.int32(b)).astype(jnp.float32)   # (N, 1)
        rows.append(jnp.max(h * m, axis=0))                        # (C2,)
    p = jnp.stack(rows, axis=0)                          # (B, C2)

    # ---- fc1 + relu, fc2 + relu (BN folded) ----
    h1 = w3_ref.shape[1]
    p = jnp.maximum(
        jnp.dot(p.astype(jnp.bfloat16), w3_ref[...],
                preferred_element_type=jnp.float32) + bp[2:3, :h1],
        jnp.float32(0.0))
    h2 = w4_ref.shape[1]
    p = jnp.maximum(
        jnp.dot(p.astype(jnp.bfloat16), w4_ref[...],
                preferred_element_type=jnp.float32) + bp[3:4, :h2],
        jnp.float32(0.0))

    # ---- fc3 + L2 normalize (dim=1), via rsqrt on the EUP ----
    emb = w5_ref.shape[1]
    y = jnp.dot(p.astype(jnp.bfloat16), w5_ref[...],
                preferred_element_type=jnp.float32) + bp[4:5, :emb]
    ssq = jnp.sum(y * y, axis=1, keepdims=True)
    o_ref[...] = y * jax.lax.rsqrt(jnp.maximum(ssq, jnp.float32(1e-24)))


# -------------------------------- JAX glue ---------------------------------- #

def build_norm_adjacency(edge_index, num_nodes):
    """Dense symmetric-normalized adjacency (PyG gcn_norm semantics).

    Duplicate edges are summed (scatter-add) and a weight-1 self-loop is added only
    for nodes that do not already have one (add_remaining_self_loops)."""
    src, dst = edge_index[0], edge_index[1]
    a = jnp.zeros((num_nodes, num_nodes), jnp.float32).at[dst, src].add(1.0)
    diag = jnp.diagonal(a)
    a = a + jnp.diag(jnp.where(diag == 0.0, 1.0, 0.0))
    deg = jnp.sum(a, axis=1)
    dinv = jnp.where(deg > 0.0, jax.lax.rsqrt(deg), 0.0)
    return a * dinv[:, None] * dinv[None, :]


def init_params(key, f_in, c1, c2, h1, h2, emb):
    def linear(k, fin, fout):
        kw, kb = jax.random.split(k)
        scale = 1.0 / jnp.sqrt(jnp.float32(fin))
        w = jax.random.normal(kw, (fin, fout), jnp.float32) * scale
        b = jax.random.normal(kb, (1, fout), jnp.float32) * 0.01
        return w, b

    def bn(k, c):
        k1, k2, k3, k4 = jax.random.split(k, 4)
        gamma = 1.0 + 0.1 * jax.random.normal(k1, (1, c), jnp.float32)
        beta = 0.1 * jax.random.normal(k2, (1, c), jnp.float32)
        mean = 0.1 * jax.random.normal(k3, (1, c), jnp.float32)
        var = jnp.abs(jax.random.normal(k4, (1, c), jnp.float32)) + 0.5
        return gamma, beta, mean, var

    ks = jax.random.split(key, 10)
    return {
        "conv1": linear(ks[0], f_in, c1), "bn1": bn(ks[1], c1),
        "conv2": linear(ks[2], c1, c2),   "bn2": bn(ks[3], c2),
        "fc1":   linear(ks[4], c2, h1),   "bn5": bn(ks[5], h1),
        "fc2":   linear(ks[6], h1, h2),   "bn6": bn(ks[7], h2),
        "fc3":   linear(ks[8], h2, emb),
    }


def _fold_bn(linear, bn, eps=1e-5):
    """Fold inference-mode BatchNorm into the preceding linear layer."""
    w, b = linear
    gamma, beta, mean, var = bn
    scale = gamma * jax.lax.rsqrt(var + jnp.float32(eps))    # (1, C)
    return w * scale, (b - mean) * scale + beta


def _prepare(params):
    """BN-fold, cast weights to bf16 for the MXU, pack biases into one (5, C_MAX) ref."""
    w1, b1 = _fold_bn(params["conv1"], params["bn1"])
    w2, b2 = _fold_bn(params["conv2"], params["bn2"])
    w3, b3 = _fold_bn(params["fc1"], params["bn5"])
    w4, b4 = _fold_bn(params["fc2"], params["bn6"])
    w5, b5 = params["fc3"]
    ws = tuple(w.astype(jnp.bfloat16) for w in (w1, w2, w3, w4, w5))
    biases = [b1, b2, b3, b4, b5]
    c_max = max(b.shape[1] for b in biases)
    bias_pack = jnp.concatenate(
        [jnp.pad(b, ((0, 0), (0, c_max - b.shape[1]))) for b in biases],
        axis=0).astype(jnp.float32)                          # (5, C_MAX)
    return ws, bias_pack


@functools.partial(jax.jit, static_argnames=("num_graphs",))
def graphnet_forward(params, x, a_hat, batch, num_graphs):
    (w1, w2, w3, w4, w5), bias_pack = _prepare(params)
    n = x.shape[0]
    emb = w5.shape[1]
    return pl.pallas_call(
        graphnet_fused_kernel,
        out_shape=jax.ShapeDtypeStruct((num_graphs, emb), jnp.float32),
        in_specs=[pl.BlockSpec(memory_space=pltpu.MemorySpace.VMEM)] * 9,
        out_specs=pl.BlockSpec(memory_space=pltpu.MemorySpace.VMEM),
    )(a_hat.astype(jnp.bfloat16),
      x.astype(jnp.bfloat16),
      batch.astype(jnp.int32).reshape(n, 1),
      w1, w2, w3, w4, w5, bias_pack)


# ---------------------------------- main ------------------------------------ #

if __name__ == "__main__":
    key = jax.random.PRNGKey(0)
    k_x, k_e, k_p = jax.random.split(key, 3)

    # Small shapes consistent with the module structure (scaled-down hidden sizes).
    N, E, B = 32, 64, 2
    F_IN, C1, C2, H1, H2, EMB = 64, 128, 256, 128, 64, 32

    x = jax.random.normal(k_x, (N, F_IN), jnp.float32)
    edge_index = jax.random.randint(k_e, (2, E), 0, N, jnp.int32)
    batch = jnp.concatenate([jnp.zeros((N // 2,), jnp.int32),
                             jnp.ones((N - N // 2,), jnp.int32)])

    a_hat = build_norm_adjacency(edge_index, N)
    params = init_params(k_p, F_IN, C1, C2, H1, H2, EMB)

    out = graphnet_forward(params, x, a_hat, batch, num_graphs=B)
    out = jax.block_until_ready(out)

    assert out.shape == (B, EMB)
    assert bool(jnp.all(jnp.isfinite(out)))
    print("KERNEL_OK")
</pallas_src>

<mosaic_0001>
module attributes {stable_mosaic.version = 11 : i64} {
  func.func @graphnet_fused_kernel(%arg0: memref<32x32xbf16, #tpu.memory_space<vmem>>, %arg1: memref<32x64xbf16, #tpu.memory_space<vmem>>, %arg2: memref<32x1xi32, #tpu.memory_space<vmem>>, %arg3: memref<64x128xbf16, #tpu.memory_space<vmem>>, %arg4: memref<128x256xbf16, #tpu.memory_space<vmem>>, %arg5: memref<256x128xbf16, #tpu.memory_space<vmem>>, %arg6: memref<128x64xbf16, #tpu.memory_space<vmem>>, %arg7: memref<64x32xbf16, #tpu.memory_space<vmem>>, %arg8: memref<5x256xf32, #tpu.memory_space<vmem>>, %arg9: memref<2x32xf32, #tpu.memory_space<vmem>>) attributes {dimension_semantics = [], scalar_prefetch = 0 : i64, scratch_operands = 0 : i64, tpu.core_type = #tpu.core_type<tc>} {
    %c0 = arith.constant 0 : index
    %c0_0 = arith.constant 0 : index
    %0 = vector.load %arg8[%c0, %c0_0] : memref<5x256xf32, #tpu.memory_space<vmem>>, vector<5x256xf32>
    %c0_1 = arith.constant 0 : index
    %c0_2 = arith.constant 0 : index
    %1 = vector.load %arg0[%c0_1, %c0_2] : memref<32x32xbf16, #tpu.memory_space<vmem>>, vector<32x32xbf16>
    %c0_3 = arith.constant 0 : index
    %c0_4 = arith.constant 0 : index
    %2 = vector.load %arg1[%c0_3, %c0_4] : memref<32x64xbf16, #tpu.memory_space<vmem>>, vector<32x64xbf16>
    %c0_5 = arith.constant 0 : index
    %c0_6 = arith.constant 0 : index
    %3 = vector.load %arg3[%c0_5, %c0_6] : memref<64x128xbf16, #tpu.memory_space<vmem>>, vector<64x128xbf16>
    %cst = arith.constant dense<0.000000e+00> : vector<32x128xf32>
    %4 = tpu.matmul %2, %3, %cst {dimension_numbers = #tpu.dot_dimension_numbers<[1], [0], [0], [1], [0, 0, 1, 1], [], []>} : vector<32x64xbf16>, vector<64x128xbf16>, vector<32x128xf32> -> vector<32x128xf32>
    %5 = arith.truncf %4 : vector<32x128xf32> to vector<32x128xbf16>
    %cst_7 = arith.constant dense<0.000000e+00> : vector<32x128xf32>
    %6 = tpu.matmul %1, %5, %cst_7 {dimension_numbers = #tpu.dot_dimension_numbers<[1], [0], [0], [1], [0, 0, 1, 1], [], []>} : vector<32x32xbf16>, vector<32x128xbf16>, vector<32x128xf32> -> vector<32x128xf32>
    %7 = vector.extract_strided_slice %0 {offsets = [0, 0], sizes = [1, 128], strides = [1, 1]} : vector<5x256xf32> to vector<1x128xf32>
    %8 = vector.broadcast %7 : vector<1x128xf32> to vector<32x128xf32>
    %9 = arith.addf %6, %8 : vector<32x128xf32>
    %cst_8 = arith.constant 0.000000e+00 : f32
    %10 = vector.broadcast %cst_8 : f32 to vector<32x128xf32>
    %11 = arith.maximumf %9, %10 : vector<32x128xf32>
    %12 = arith.truncf %11 : vector<32x128xf32> to vector<32x128xbf16>
    %c0_9 = arith.constant 0 : index
    %c0_10 = arith.constant 0 : index
    %13 = vector.load %arg4[%c0_9, %c0_10] : memref<128x256xbf16, #tpu.memory_space<vmem>>, vector<128x256xbf16>
    %cst_11 = arith.constant dense<0.000000e+00> : vector<32x256xf32>
    %14 = tpu.matmul %12, %13, %cst_11 {dimension_numbers = #tpu.dot_dimension_numbers<[1], [0], [0], [1], [0, 0, 1, 1], [], []>} : vector<32x128xbf16>, vector<128x256xbf16>, vector<32x256xf32> -> vector<32x256xf32>
    %15 = arith.truncf %14 : vector<32x256xf32> to vector<32x256xbf16>
    %cst_12 = arith.constant dense<0.000000e+00> : vector<32x256xf32>
    %16 = tpu.matmul %1, %15, %cst_12 {dimension_numbers = #tpu.dot_dimension_numbers<[1], [0], [0], [1], [0, 0, 1, 1], [], []>} : vector<32x32xbf16>, vector<32x256xbf16>, vector<32x256xf32> -> vector<32x256xf32>
    %17 = vector.extract_strided_slice %0 {offsets = [1, 0], sizes = [1, 256], strides = [1, 1]} : vector<5x256xf32> to vector<1x256xf32>
    %18 = vector.broadcast %17 : vector<1x256xf32> to vector<32x256xf32>
    %19 = arith.addf %16, %18 : vector<32x256xf32>
    %cst_13 = arith.constant 0.000000e+00 : f32
    %20 = vector.broadcast %cst_13 : f32 to vector<32x256xf32>
    %21 = arith.maximumf %19, %20 : vector<32x256xf32>
    %c0_14 = arith.constant 0 : index
    %c0_15 = arith.constant 0 : index
    %22 = vector.load %arg2[%c0_14, %c0_15] : memref<32x1xi32, #tpu.memory_space<vmem>>, vector<32x1xi32>
    %c0_i32 = arith.constant 0 : i32
    %23 = vector.broadcast %c0_i32 : i32 to vector<32x1xi32>
    %24 = arith.cmpi eq, %22, %23 : vector<32x1xi32>
    %25 = arith.extui %24 : vector<32x1xi1> to vector<32x1xi32>
    %26 = arith.sitofp %25 : vector<32x1xi32> to vector<32x1xf32>
    %27 = vector.broadcast %26 : vector<32x1xf32> to vector<32x256xf32>
    %28 = arith.mulf %21, %27 : vector<32x256xf32>
    %cst_16 = arith.constant dense<0xFF800000> : vector<256xf32>
    %29 = vector.multi_reduction <maximumf>, %28, %cst_16 [0] : vector<32x256xf32> to vector<256xf32>
    %c0_17 = arith.constant 0 : index
    %c0_18 = arith.constant 0 : index
    %30 = vector.load %arg2[%c0_17, %c0_18] : memref<32x1xi32, #tpu.memory_space<vmem>>, vector<32x1xi32>
    %c1_i32 = arith.constant 1 : i32
    %31 = vector.broadcast %c1_i32 : i32 to vector<32x1xi32>
    %32 = arith.cmpi eq, %30, %31 : vector<32x1xi32>
    %33 = arith.extui %32 : vector<32x1xi1> to vector<32x1xi32>
    %34 = arith.sitofp %33 : vector<32x1xi32> to vector<32x1xf32>
    %35 = vector.broadcast %34 : vector<32x1xf32> to vector<32x256xf32>
    %36 = arith.mulf %21, %35 : vector<32x256xf32>
    %cst_19 = arith.constant dense<0xFF800000> : vector<256xf32>
    %37 = vector.multi_reduction <maximumf>, %36, %cst_19 [0] : vector<32x256xf32> to vector<256xf32>
    %38 = vector.shape_cast %29 : vector<256xf32> to vector<1x256xf32>
    %39 = vector.shape_cast %37 : vector<256xf32> to vector<1x256xf32>
    %40 = tpu.concatenate %38, %39 in 0 : vector<1x256xf32>, vector<1x256xf32> -> vector<2x256xf32>
    %41 = arith.truncf %40 : vector<2x256xf32> to vector<2x256xbf16>
    %c0_20 = arith.constant 0 : index
    %c0_21 = arith.constant 0 : index
    %42 = vector.load %arg5[%c0_20, %c0_21] : memref<256x128xbf16, #tpu.memory_space<vmem>>, vector<256x128xbf16>
    %cst_22 = arith.constant dense<0.000000e+00> : vector<2x128xf32>
    %43 = tpu.matmul %41, %42, %cst_22 {dimension_numbers = #tpu.dot_dimension_numbers<[1], [0], [0], [1], [0, 0, 1, 1], [], []>} : vector<2x256xbf16>, vector<256x128xbf16>, vector<2x128xf32> -> vector<2x128xf32>
    %44 = vector.extract_strided_slice %0 {offsets = [2, 0], sizes = [1, 128], strides = [1, 1]} : vector<5x256xf32> to vector<1x128xf32>
    %45 = vector.broadcast %44 : vector<1x128xf32> to vector<2x128xf32>
    %46 = arith.addf %43, %45 : vector<2x128xf32>
    %cst_23 = arith.constant 0.000000e+00 : f32
    %47 = vector.broadcast %cst_23 : f32 to vector<2x128xf32>
    %48 = arith.maximumf %46, %47 : vector<2x128xf32>
    %49 = arith.truncf %48 : vector<2x128xf32> to vector<2x128xbf16>
    %c0_24 = arith.constant 0 : index
    %c0_25 = arith.constant 0 : index
    %50 = vector.load %arg6[%c0_24, %c0_25] : memref<128x64xbf16, #tpu.memory_space<vmem>>, vector<128x64xbf16>
    %cst_26 = arith.constant dense<0.000000e+00> : vector<2x64xf32>
    %51 = tpu.matmul %49, %50, %cst_26 {dimension_numbers = #tpu.dot_dimension_numbers<[1], [0], [0], [1], [0, 0, 1, 1], [], []>} : vector<2x128xbf16>, vector<128x64xbf16>, vector<2x64xf32> -> vector<2x64xf32>
    %52 = vector.extract_strided_slice %0 {offsets = [3, 0], sizes = [1, 64], strides = [1, 1]} : vector<5x256xf32> to vector<1x64xf32>
    %53 = vector.broadcast %52 : vector<1x64xf32> to vector<2x64xf32>
    %54 = arith.addf %51, %53 : vector<2x64xf32>
    %cst_27 = arith.constant 0.000000e+00 : f32
    %55 = vector.broadcast %cst_27 : f32 to vector<2x64xf32>
    %56 = arith.maximumf %54, %55 : vector<2x64xf32>
    %57 = arith.truncf %56 : vector<2x64xf32> to vector<2x64xbf16>
    %c0_28 = arith.constant 0 : index
    %c0_29 = arith.constant 0 : index
    %58 = vector.load %arg7[%c0_28, %c0_29] : memref<64x32xbf16, #tpu.memory_space<vmem>>, vector<64x32xbf16>
    %cst_30 = arith.constant dense<0.000000e+00> : vector<2x32xf32>
    %59 = tpu.matmul %57, %58, %cst_30 {dimension_numbers = #tpu.dot_dimension_numbers<[1], [0], [0], [1], [0, 0, 1, 1], [], []>} : vector<2x64xbf16>, vector<64x32xbf16>, vector<2x32xf32> -> vector<2x32xf32>
    %60 = vector.extract_strided_slice %0 {offsets = [4, 0], sizes = [1, 32], strides = [1, 1]} : vector<5x256xf32> to vector<1x32xf32>
    %61 = vector.broadcast %60 : vector<1x32xf32> to vector<2x32xf32>
    %62 = arith.addf %59, %61 : vector<2x32xf32>
    %63 = arith.mulf %62, %62 : vector<2x32xf32>
    %cst_31 = arith.constant dense<0.000000e+00> : vector<2xf32>
    %64 = vector.multi_reduction <add>, %63, %cst_31 [1] : vector<2x32xf32> to vector<2xf32>
    %65 = vector.shape_cast %64 : vector<2xf32> to vector<2x1xf32>
    %cst_32 = arith.constant 1.000000e-24 : f32
    %66 = vector.broadcast %cst_32 : f32 to vector<2x1xf32>
    %67 = arith.maximumf %65, %66 : vector<2x1xf32>
    %68 = math.rsqrt %67 : vector<2x1xf32>
    %69 = vector.broadcast %68 : vector<2x1xf32> to vector<2x32xf32>
    %70 = arith.mulf %62, %69 : vector<2x32xf32>
    %c0_33 = arith.constant 0 : index
    %c0_34 = arith.constant 0 : index
    %71 = vector.load %arg9[%c0_33, %c0_34] : memref<2x32xf32, #tpu.memory_space<vmem>>, vector<2x32xf32>
    tpu.vector_store %arg9[%c0_33, %c0_34], %70 {strides = array<i32>} : memref<2x32xf32, #tpu.memory_space<vmem>>, vector<2x32xf32>,
    return
  }
}

</mosaic_0001>

<llo_original>
// kernel: graphnet_forward.1
$region0: #{graphnet_forward.1}
  #allocation0 [shape = 'u32[]', space=smem, size = 0x4, offset = 0x4, fixed_abs, tag = 'smem constant byte address 0x4 - core index']
  #allocation1 [shape = 'u32[144,128]{1,0:T(1,128)}', space=vmem, size = 0x12000, scoped, tag = 'internal scratch']
  %s0 = inlined_call_operand.vmem [shape: bf16[32,32], index: 0, kind: input, shape index: {}]
  %s1 = inlined_call_operand.vmem [shape: bf16[32,64], index: 1, kind: input, shape index: {}]
  %s2 = inlined_call_operand.vmem [shape: s32[32,1], index: 2, kind: input, shape index: {}]
  %s3 = inlined_call_operand.vmem [shape: bf16[64,128], index: 3, kind: input, shape index: {}]
  %s4 = inlined_call_operand.vmem [shape: bf16[128,256], index: 4, kind: input, shape index: {}]
  %s5 = inlined_call_operand.vmem [shape: bf16[256,128], index: 5, kind: input, shape index: {}]
  %s6 = inlined_call_operand.vmem [shape: bf16[128,64], index: 6, kind: input, shape index: {}]
  %s7 = inlined_call_operand.vmem [shape: bf16[64,32], index: 7, kind: input, shape index: {}]
  %s8 = inlined_call_operand.vmem [shape: f32[5,256], index: 8, kind: input, shape index: {}]
  %s9 = inlined_call_operand.hbm [shape: f32[2,32], index: 9, kind: output, shape index: {}]
  %s10 = sld [smem:[#allocation0]]
  $region46: #{graphnet_forward.1} parent=0
    _
  %s12 = ssub.s32 1, %s10
  %s13 = scalar_select 0, %s12, %s10
  $region1: #{graphnet_forward.1} parent=0
    #allocation2 [shape = 'u8[1024]{0}', space=vmem, size = 0x400, scoped, tag = 'output window, operand 0, single buffered']
    #allocation3 [shape = 's32[1]{0}', space=sflag, size = 0x4, scoped, tag = 'scoped memory for graphnet_forward.1']
    %14 = vsyncpa [#allocation3], 0
    // Predicated region
    $region2: #{graphnet_forward.1} parent=1 // pred_check
      _
    $region3: #{graphnet_forward.1} parent=1 // pred_check_branch
      %16 = sbr.rel (0) target = $region5
    $region4: #{graphnet_forward.1} parent=1 // pred_region
      _
    $region5: #{graphnet_forward.1} parent=1 // pred_fallthru
      _
    // Predicated region
    $region6: #{graphnet_forward.1} parent=1 // pred_check
      _
    $region7: #{graphnet_forward.1} parent=1 // pred_check_branch
      %18 = sbr.rel (0) target = $region9
    $region8: #{graphnet_forward.1} parent=1 // pred_region
      _
    $region9: #{graphnet_forward.1} parent=1 // pred_fallthru
      _
    // Predicated region
    $region10: #{graphnet_forward.1} parent=1 // pred_check
      _
    $region11: #{graphnet_forward.1} parent=1 // pred_check_branch
      %20 = sbr.rel (0) target = $region13
    $region12: #{graphnet_forward.1} parent=1 // pred_region
      _
    $region13: #{graphnet_forward.1} parent=1 // pred_fallthru
      _
    // Predicated region
    $region14: #{graphnet_forward.1} parent=1 // pred_check
      _
    $region15: #{graphnet_forward.1} parent=1 // pred_check_branch
      %22 = sbr.rel (0) target = $region17
    $region16: #{graphnet_forward.1} parent=1 // pred_region
      _
    $region17: #{graphnet_forward.1} parent=1 // pred_fallthru
      _
    // Predicated region
    $region18: #{graphnet_forward.1} parent=1 // pred_check
      _
    $region19: #{graphnet_forward.1} parent=1 // pred_check_branch
      %24 = sbr.rel (0) target = $region21
    $region20: #{graphnet_forward.1} parent=1 // pred_region
      _
    $region21: #{graphnet_forward.1} parent=1 // pred_fallthru
      _
    // Predicated region
    $region22: #{graphnet_forward.1} parent=1 // pred_check
      _
    $region23: #{graphnet_forward.1} parent=1 // pred_check_branch
      %26 = sbr.rel (0) target = $region25
    $region24: #{graphnet_forward.1} parent=1 // pred_region
      _
    $region25: #{graphnet_forward.1} parent=1 // pred_fallthru
      _
    // Predicated region
    $region26: #{graphnet_forward.1} parent=1 // pred_check
      _
    $region27: #{graphnet_forward.1} parent=1 // pred_check_branch
      %28 = sbr.rel (0) target = $region29
    $region28: #{graphnet_forward.1} parent=1 // pred_region
      _
    $region29: #{graphnet_forward.1} parent=1 // pred_fallthru
      _
    // Predicated region
    $region30: #{graphnet_forward.1} parent=1 // pred_check
      _
    $region31: #{graphnet_forward.1} parent=1 // pred_check_branch
      %30 = sbr.rel (0) target = $region33
    $region32: #{graphnet_forward.1} parent=1 // pred_region
      _
    $region33: #{graphnet_forward.1} parent=1 // pred_fallthru
      _
    // Predicated region
    $region34: #{graphnet_forward.1} parent=1 // pred_check
      _
    $region35: #{graphnet_forward.1} parent=1 // pred_check_branch
      %32 = sbr.rel (0) target = $region37
    $region36: #{graphnet_forward.1} parent=1 // pred_region
      _
    $region37: #{graphnet_forward.1} parent=1 // pred_fallthru
      _
    %v34 = vld [vmem:[%s8] sm:$0x1f]
    %v35 = vld [vmem:[%s8 + $0x8] sm:$0x1f]
    %v36 = vld [vmem:[%s0] sm:$0xf]
    %v37 = vld [vmem:[%s0 + $0x4] sm:$0xf]
    %v38 = vld [vmem:[%s0 + $0x8] sm:$0xf]
    %v39 = vld [vmem:[%s0 + $0xc] sm:$0xf]
    %v40 = vld [vmem:[%s1] sm:$0xf]
    %v41 = vld [vmem:[%s1 + $0x4] sm:$0xf]
    %v42 = vld [vmem:[%s1 + $0x8] sm:$0xf]
    %v43 = vld [vmem:[%s1 + $0xc] sm:$0xf]
    %v44 = vld [vmem:[%s3] sm:$0xf]
    %v45 = vld [vmem:[%s3 + $0x4] sm:$0xf]
    %v46 = vld [vmem:[%s3 + $0x8] sm:$0xf]
    %v47 = vld [vmem:[%s3 + $0xc] sm:$0xf]
    %v48 = vld [vmem:[%s3 + $0x10] sm:$0xf]
    %v49 = vld [vmem:[%s3 + $0x14] sm:$0xf]
    %v50 = vld [vmem:[%s3 + $0x18] sm:$0xf]
    %v51 = vld [vmem:[%s3 + $0x1c] sm:$0xf]
    %v56 = vunpack.c.l.b16 %v40
    %v57 = vunpack.c.l.b16 %v41
    %v58 = vunpack.c.l.b16 %v42
    %v59 = vunpack.c.l.b16 %v43
    %v60 = vpack.c.b16 %v57, %v56
    %v61 = vpack.c.b16 %v59, %v58
    %v70 = vunpack.c.l.b16 %v44
    %v71 = vunpack.c.l.b16 %v45
    %v72 = vunpack.c.l.b16 %v46
    %v73 = vunpack.c.l.b16 %v47
    %v74 = vunpack.c.l.b16 %v48
    %v75 = vunpack.c.l.b16 %v49
    %v76 = vunpack.c.l.b16 %v50
    %v77 = vunpack.c.l.b16 %v51
    %v78 = vpack.c.b16 %v71, %v70
    %v79 = vpack.c.b16 %v73, %v72
    %v80 = vpack.c.b16 %v75, %v74
    %v81 = vpack.c.b16 %v77, %v76
    %vm86 = vcmask 523264
    %v88 = vsel %vm86, %v60, 0
    %v91 = vsel %vm86, %v61, 0
    %93 = vmatprep.subr.bf16.mxu0 0
    %94 = vmatpush1.bf16.msra.mxu0 %v78
    %95 = vmatprep.subr.bf16.mxu0 0
    %96 = vmatpush1.bf16.msra.mxu0 %v79
    %97 = vmatprep.subr.bf16.mxu0 0
    %98 = vmatpush1.bf16.msra.mxu0 %v80
    %99 = vmatprep.subr.bf16.mxu0 0
    %100 = vmatpush1.bf16.msra.mxu0 %v81
    %101 = vmatprep.subr.bf16.mxu0 0
    %102 = vmatpush1.bf16.msra.mxu0 0
    %103 = vmatprep.subr.bf16.mxu0 0
    %104 = vmatpush1.bf16.msra.mxu0 0
    %105 = vmatprep.subr.bf16.mxu0 0
    %106 = vmatpush1.bf16.msra.mxu0 0
    %107 = vmatprep.subr.bf16.mxu0 0
    %108 = vmatpush1.bf16.msra.mxu0 0
    %109 = vmatprep.subr.bf16.mxu0 0
    %110 = vmatpush1.bf16.msra.mxu0 0
    %111 = vmatprep.subr.bf16.mxu0 0
    %112 = vmatpush1.bf16.msra.mxu0 0
    %113 = vmatprep.subr.bf16.mxu0 0
    %114 = vmatpush1.bf16.msra.mxu0 0
    %115 = vmatprep.subr.bf16.mxu0 0
    %116 = vmatpush1.bf16.msra.mxu0 0
    %117 = vmatprep.subr.bf16.mxu0 0
    %118 = vmatpush1.bf16.msra.mxu0 0
    %119 = vmatprep.subr.bf16.mxu0 0
    %120 = vmatpush1.bf16.msra.mxu0 0
    %121 = vmatprep.subr.bf16.mxu0 0
    %122 = vmatpush1.bf16.msra.mxu0 0
    %123 = vmatprep.subr.bf16.mxu0 0
    %124 = vmatpush1.bf16.msra.mxu0 0
    %125 = vmatprep.mubr.bf16.mxu0 0
    %126 = vmatmul.mubr.bf16.gmra.mrb[0].mxu0 %v88
    %v127 = vpop.f32.mrb[0].mxu0
    %v128 = vadd.f32 0.0, %v127
    %v129 = vpop.f32.mrb[0].mxu0
    %v130 = vpop.f32.mrb[0].mxu0
    %v131 = vadd.f32 0.0, %v130
    %v132 = vpop.f32.mrb[0].mxu0
    %133 = vmatprep.mubr.bf16.mxu0 0
    %134 = vmatmul.mubr.bf16.gmra.mrb[0].mxu0 %v91
    %v135 = vpop.f32.mrb[0].mxu0
    %v136 = vadd.f32 0.0, %v135
    %v137 = vpop.f32.mrb[0].mxu0
    %v138 = vpop.f32.mrb[0].mxu0
    %v139 = vadd.f32 0.0, %v138
    %v140 = vpop.f32.mrb[0].mxu0
    %141 = vdwg.mxu0
    %v142 = vpack.c.bf16 %v131, %v128
    %v143 = vpack.c.bf16 %v139, %v136
    %v144 = vlaneseq
    %v145 = vshrl.u32 %v144, 7
    %v146 = vsub.s32 0, %v145
    %v147 = vrot.slane %v34, %v146
    %v152 = vunpack.c.l.b16 %v36
    %v153 = vunpack.c.l.b16 %v37
    %v154 = vunpack.c.l.b16 %v38
    %v155 = vunpack.c.l.b16 %v39
    %v156 = vpack.c.b16 %v153, %v152
    %v157 = vpack.c.b16 %v155, %v154
    %vm158 = vcmask 261120
    %v160 = vsel %vm158, %v156, 0
    %v163 = vsel %vm158, %v157, 0
    %165 = vmatprep.subr.bf16.mxu0 0
    %166 = vmatpush1.bf16.msra.mxu0 %v142
    %167 = vmatprep.subr.bf16.mxu0 0
    %168 = vmatpush1.bf16.msra.mxu0 %v143
    %169 = vmatprep.subr.bf16.mxu0 0
    %170 = vmatpush1.bf16.msra.mxu0 0
    %171 = vmatprep.subr.bf16.mxu0 0
    %172 = vmatpush1.bf16.msra.mxu0 0
    %173 = vmatprep.subr.bf16.mxu0 0
    %174 = vmatpush1.bf16.msra.mxu0 0
    %175 = vmatprep.subr.bf16.mxu0 0
    %176 = vmatpush1.bf16.msra.mxu0 0
    %177 = vmatprep.subr.bf16.mxu0 0
    %178 = vmatpush1.bf16.msra.mxu0 0
    %179 = vmatprep.subr.bf16.mxu0 0
    %180 = vmatpush1.bf16.msra.mxu0 0
    %181 = vmatprep.subr.bf16.mxu0 0
    %182 = vmatpush1.bf16.msra.mxu0 0
    %183 = vmatprep.subr.bf16.mxu0 0
    %184 = vmatpush1.bf16.msra.mxu0 0
    %185 = vmatprep.subr.bf16.mxu0 0
    %186 = vmatpush1.bf16.msra.mxu0 0
    %187 = vmatprep.subr.bf16.mxu0 0
    %188 = vmatpush1.bf16.msra.mxu0 0
    %189 = vmatprep.subr.bf16.mxu0 0
    %190 = vmatpush1.bf16.msra.mxu0 0
    %191 = vmatprep.subr.bf16.mxu0 0
    %192 = vmatpush1.bf16.msra.mxu0 0
    %193 = vmatprep.subr.bf16.mxu0 0
    %194 = vmatpush1.bf16.msra.mxu0 0
    %195 = vmatprep.subr.bf16.mxu0 0
    %196 = vmatpush1.bf16.msra.mxu0 0
    %197 = vmatprep.mubr.bf16.mxu0 0
    %198 = vmatmul.mubr.bf16.gmra.mrb[0].mxu0 %v160
    %v199 = vpop.f32.mrb[0].mxu0
    %v200 = vadd.f32 %v147, %v199
    %v201 = vpop.f32.mrb[0].mxu0
    %v202 = vpop.f32.mrb[0].mxu0
    %v203 = vadd.f32 %v147, %v202
    %v204 = vpop.f32.mrb[0].mxu0
    %205 = vmatprep.mubr.bf16.mxu0 0
    %206 = vmatmul.mubr.bf16.gmra.mrb[0].mxu0 %v163
    %v207 = vpop.f32.mrb[0].mxu0
    %v208 = vadd.f32 %v147, %v207
    %v209 = vpop.f32.mrb[0].mxu0
    %v210 = vpop.f32.mrb[0].mxu0
    %v211 = vadd.f32 %v147, %v210
    %v212 = vpop.f32.mrb[0].mxu0
    %213 = vdwg.mxu0
    %v214 = vmax.f32 %v200, 0.0
    %v215 = vmax.f32 %v203, 0.0
    %v216 = vmax.f32 %v208, 0.0
    %v217 = vmax.f32 %v211, 0.0
    %v218 = vpack.c.bf16 %v215, %v214
    %v219 = vpack.c.bf16 %v217, %v216
    %v220 = vld [vmem:[%s4] sm:$0xff]
    %v221 = vld [vmem:[%s4 + $0x8] sm:$0xff]
    %v222 = vld [vmem:[%s4 + $0x10] sm:$0xff]
    %v223 = vld [vmem:[%s4 + $0x18] sm:$0xff]
    %v224 = vld [vmem:[%s4 + $0x20] sm:$0xff]
    %v225 = vld [vmem:[%s4 + $0x28] sm:$0xff]
    %v226 = vld [vmem:[%s4 + $0x30] sm:$0xff]
    %v227 = vld [vmem:[%s4 + $0x38] sm:$0xff]
    %v228 = vld [vmem:[%s4 + $0x40] sm:$0xff]
    %v229 = vld [vmem:[%s4 + $0x48] sm:$0xff]
    %v230 = vld [vmem:[%s4 + $0x50] sm:$0xff]
    %v231 = vld [vmem:[%s4 + $0x58] sm:$0xff]
    %v232 = vld [vmem:[%s4 + $0x60] sm:$0xff]
    %v233 = vld [vmem:[%s4 + $0x68] sm:$0xff]
    %v234 = vld [vmem:[%s4 + $0x70] sm:$0xff]
    %v235 = vld [vmem:[%s4 + $0x78] sm:$0xff]
    %v252 = vunpack.c.l.b16 %v220
    %v253 = vunpack.c.h.b16 %v220
    %v254 = vunpack.c.l.b16 %v221
    %v255 = vunpack.c.h.b16 %v221
    %v256 = vunpack.c.l.b16 %v222
    %v257 = vunpack.c.h.b16 %v222
    %v258 = vunpack.c.l.b16 %v223
    %v259 = vunpack.c.h.b16 %v223
    %v260 = vunpack.c.l.b16 %v224
    %v261 = vunpack.c.h.b16 %v224
    %v262 = vunpack.c.l.b16 %v225
    %v263 = vunpack.c.h.b16 %v225
    %v264 = vunpack.c.l.b16 %v226
    %v265 = vunpack.c.h.b16 %v226
    %v266 = vunpack.c.l.b16 %v227
    %v267 = vunpack.c.h.b16 %v227
    %v268 = vunpack.c.l.b16 %v228
    %v269 = vunpack.c.h.b16 %v228
    %v270 = vunpack.c.l.b16 %v229
    %v271 = vunpack.c.h.b16 %v229
    %v272 = vunpack.c.l.b16 %v230
    %v273 = vunpack.c.h.b16 %v230
    %v274 = vunpack.c.l.b16 %v231
    %v275 = vunpack.c.h.b16 %v231
    %v276 = vunpack.c.l.b16 %v232
    %v277 = vunpack.c.h.b16 %v232
    %v278 = vunpack.c.l.b16 %v233
    %v279 = vunpack.c.h.b16 %v233
    %v280 = vunpack.c.l.b16 %v234
    %v281 = vunpack.c.h.b16 %v234
    %v282 = vunpack.c.l.b16 %v235
    %v283 = vunpack.c.h.b16 %v235
    %v284 = vpack.c.b16 %v254, %v252
    %v285 = vpack.c.b16 %v255, %v253
    %v286 = vpack.c.b16 %v258, %v256
    %v287 = vpack.c.b16 %v259, %v257
    %v288 = vpack.c.b16 %v262, %v260
    %v289 = vpack.c.b16 %v263, %v261
    %v290 = vpack.c.b16 %v266, %v264
    %v291 = vpack.c.b16 %v267, %v265
    %v292 = vpack.c.b16 %v270, %v268
    %v293 = vpack.c.b16 %v271, %v269
    %v294 = vpack.c.b16 %v274, %v272
    %v295 = vpack.c.b16 %v275, %v273
    %v296 = vpack.c.b16 %v278, %v276
    %v297 = vpack.c.b16 %v279, %v277
    %v298 = vpack.c.b16 %v282, %v280
    %v299 = vpack.c.b16 %v283, %v281
    %316 = vmatprep.subr.bf16.mxu0 %v285
    %317 = vmatpush1.bf16.msra.mxu0 %v284
    %318 = vmatprep.subr.bf16.mxu0 %v287
    %319 = vmatpush1.bf16.msra.mxu0 %v286
    %320 = vmatprep.subr.bf16.mxu0 %v289
    %321 = vmatpush1.bf16.msra.mxu0 %v288
    %322 = vmatprep.subr.bf16.mxu0 %v291
    %323 = vmatpush1.bf16.msra.mxu0 %v290
    %324 = vmatprep.subr.bf16.mxu0 %v293
    %325 = vmatpush1.bf16.msra.mxu0 %v292
    %326 = vmatprep.subr.bf16.mxu0 %v295
    %327 = vmatpush1.bf16.msra.mxu0 %v294
    %328 = vmatprep.subr.bf16.mxu0 %v297
    %329 = vmatpush1.bf16.msra.mxu0 %v296
    %330 = vmatprep.subr.bf16.mxu0 %v299
    %331 = vmatpush1.bf16.msra.mxu0 %v298
    %332 = vmatprep.subr.bf16.mxu0 0
    %333 = vmatpush1.bf16.msra.mxu0 0
    %334 = vmatprep.subr.bf16.mxu0 0
    %335 = vmatpush1.bf16.msra.mxu0 0
    %336 = vmatprep.subr.bf16.mxu0 0
    %337 = vmatpush1.bf16.msra.mxu0 0
    %338 = vmatprep.subr.bf16.mxu0 0
    %339 = vmatpush1.bf16.msra.mxu0 0
    %340 = vmatprep.subr.bf16.mxu0 0
    %341 = vmatpush1.bf16.msra.mxu0 0
    %342 = vmatprep.subr.bf16.mxu0 0
    %343 = vmatpush1.bf16.msra.mxu0 0
    %344 = vmatprep.subr.bf16.mxu0 0
    %345 = vmatpush1.bf16.msra.mxu0 0
    %346 = vmatprep.subr.bf16.mxu0 0
    %347 = vmatpush1.bf16.msra.mxu0 0
    %348 = vmatprep.mubr.bf16.mxu0 0
    %349 = vmatmul.mubr.bf16.gmra.mrb[0].mxu0 %v218
    %v350 = vpop.f32.mrb[0].mxu0
    %v351 = vadd.f32 0.0, %v350
    %v352 = vpop.f32.mrb[0].mxu0
    %v353 = vadd.f32 0.0, %v352
    %v354 = vpop.f32.mrb[0].mxu0
    %v355 = vadd.f32 0.0, %v354
    %v356 = vpop.f32.mrb[0].mxu0
    %v357 = vadd.f32 0.0, %v356
    %358 = vmatprep.mubr.bf16.mxu0 0
    %359 = vmatmul.mubr.bf16.gmra.mrb[0].mxu0 %v219
    %v360 = vpop.f32.mrb[0].mxu0
    %v361 = vadd.f32 0.0, %v360
    %v362 = vpop.f32.mrb[0].mxu0
    %v363 = vadd.f32 0.0, %v362
    %v364 = vpop.f32.mrb[0].mxu0
    %v365 = vadd.f32 0.0, %v364
    %v366 = vpop.f32.mrb[0].mxu0
    %v367 = vadd.f32 0.0, %v366
    %368 = vdwg.mxu0
    %v369 = vpack.c.bf16 %v355, %v351
    %v370 = vpack.c.bf16 %v357, %v353
    %v371 = vpack.c.bf16 %v365, %v361
    %v372 = vpack.c.bf16 %v367, %v363
    %v373 = vlaneseq
    %v374 = vshrl.u32 %v373, 7
    %v375 = vsub.s32 1, %v374
    %v376 = vrot.slane %v34, %v375
    %v377 = vlaneseq
    %v378 = vshrl.u32 %v377, 7
    %v379 = vsub.s32 1, %v378
    %v380 = vrot.slane %v35, %v379
    %381 = vmatprep.subr.bf16.mxu0 %v370
    %382 = vmatpush1.bf16.msra.mxu0 %v369
    %383 = vmatprep.subr.bf16.mxu0 %v372
    %384 = vmatpush1.bf16.msra.mxu0 %v371
    %385 = vmatprep.subr.bf16.mxu0 0
    %386 = vmatpush1.bf16.msra.mxu0 0
    %387 = vmatprep.subr.bf16.mxu0 0
    %388 = vmatpush1.bf16.msra.mxu0 0
    %389 = vmatprep.subr.bf16.mxu0 0
    %390 = vmatpush1.bf16.msra.mxu0 0
    %391 = vmatprep.subr.bf16.mxu0 0
    %392 = vmatpush1.bf16.msra.mxu0 0
    %393 = vmatprep.subr.bf16.mxu0 0
    %394 = vmatpush1.bf16.msra.mxu0 0
    %395 = vmatprep.subr.bf16.mxu0 0
    %396 = vmatpush1.bf16.msra.mxu0 0
    %397 = vmatprep.subr.bf16.mxu0 0
    %398 = vmatpush1.bf16.msra.mxu0 0
    %399 = vmatprep.subr.bf16.mxu0 0
    %400 = vmatpush1.bf16.msra.mxu0 0
    %401 = vmatprep.subr.bf16.mxu0 0
    %402 = vmatpush1.bf16.msra.mxu0 0
    %403 = vmatprep.subr.bf16.mxu0 0
    %404 = vmatpush1.bf16.msra.mxu0 0
    %405 = vmatprep.subr.bf16.mxu0 0
    %406 = vmatpush1.bf16.msra.mxu0 0
    %407 = vmatprep.subr.bf16.mxu0 0
    %408 = vmatpush1.bf16.msra.mxu0 0
    %409 = vmatprep.subr.bf16.mxu0 0
    %410 = vmatpush1.bf16.msra.mxu0 0
    %411 = vmatprep.subr.bf16.mxu0 0
    %412 = vmatpush1.bf16.msra.mxu0 0
    %413 = vmatprep.mubr.bf16.mxu0 0
    %414 = vmatmul.mubr.bf16.gmra.mrb[0].mxu0 %v160
    %v415 = vpop.f32.mrb[0].mxu0
    %v416 = vadd.f32 %v376, %v415
    %v417 = vpop.f32.mrb[0].mxu0
    %v418 = vadd.f32 %v380, %v417
    %v419 = vpop.f32.mrb[0].mxu0
    %v420 = vadd.f32 %v376, %v419
    %v421 = vpop.f32.mrb[0].mxu0
    %v422 = vadd.f32 %v380, %v421
    %423 = vmatprep.mubr.bf16.mxu0 0
    %424 = vmatmul.mubr.bf16.gmra.mrb[0].mxu0 %v163
    %v425 = vpop.f32.mrb[0].mxu0
    %v426 = vadd.f32 %v376, %v425
    %v427 = vpop.f32.mrb[0].mxu0
    %v428 = vadd.f32 %v380, %v427
    %v429 = vpop.f32.mrb[0].mxu0
    %v430 = vadd.f32 %v376, %v429
    %v431 = vpop.f32.mrb[0].mxu0
    %v432 = vadd.f32 %v380, %v431
    %433 = vdwg.mxu0
    %v434 = vmax.f32 %v416, 0.0
    %v435 = vmax.f32 %v418, 0.0
    %v436 = vmax.f32 %v420, 0.0
    %v437 = vmax.f32 %v422, 0.0
    %v438 = vmax.f32 %v426, 0.0
    %v439 = vmax.f32 %v428, 0.0
    %v440 = vmax.f32 %v430, 0.0
    %v441 = vmax.f32 %v432, 0.0
    %v442 = vld [vmem:[%s2] sm:$0xff]
    %v443 = vld [vmem:[%s2 + $0x8] sm:$0xff]
    %v444 = vld [vmem:[%s2 + $0x10] sm:$0xff]
    %v445 = vld [vmem:[%s2 + $0x18] sm:$0xff]
    %vm446 = vcmp.eq.s32.totalorder %v442, 0
    %vm447 = vcmp.eq.s32.totalorder %v443, 0
    %vm448 = vcmp.eq.s32.totalorder %v444, 0
    %vm449 = vcmp.eq.s32.totalorder %v445, 0
    %v450 = vsel %vm446, 1, 0
    %v451 = vsel %vm447, 1, 0
    %v452 = vsel %vm448, 1, 0
    %v453 = vsel %vm449, 1, 0
    %v454 = vcvt.s32.f32 %v450
    %v455 = vcvt.s32.f32 %v451
    %v456 = vcvt.s32.f32 %v452
    %v457 = vcvt.s32.f32 %v453
    %459 = vset.pattern.permute.xlu0 0
    %460 = vperm.xlu0 %459, %v454
    %v461 = vpop.permute.xlu0 %460
    %464 = vset.pattern.permute.xlu0 0
    %465 = vperm.xlu0 %464, %v455
    %v466 = vpop.permute.xlu0 %465
    %469 = vset.pattern.permute.xlu0 0
    %470 = vperm.xlu0 %469, %v456
    %v471 = vpop.permute.xlu0 %470
    %474 = vset.pattern.permute.xlu0 0
    %475 = vperm.xlu0 %474, %v457
    %v476 = vpop.permute.xlu0 %475
    %v478 = vmul.f32 %v434, %v461
    %v479 = vmul.f32 %v435, %v461
    %v480 = vmul.f32 %v436, %v466
    %v481 = vmul.f32 %v437, %v466
    %v482 = vmul.f32 %v438, %v471
    %v483 = vmul.f32 %v439, %v471
    %v484 = vmul.f32 %v440, %v476
    %v485 = vmul.f32 %v441, %v476
    %v486 = vmax.f32 %v478, %v482
    %v487 = vmax.f32 %v480, %v484
    %v488 = vmax.f32 %v486, %v487
    %v489 = vrot.slane %v488, 4
    %v490 = vmax.f32 %v488, %v489
    %v491 = vrot.slane %v490, 2
    %v492 = vmax.f32 %v490, %v491
    %v493 = vrot.slane %v492, 1
    %v494 = vmax.f32 %v492, %v493
    %v495 = vmax.f32 %v479, %v483
    %v496 = vmax.f32 %v481, %v485
    %v497 = vmax.f32 %v495, %v496
    %v498 = vrot.slane %v497, 4
    %v499 = vmax.f32 %v497, %v498
    %v500 = vrot.slane %v499, 2
    %v501 = vmax.f32 %v499, %v500
    %v502 = vrot.slane %v501, 1
    %v503 = vmax.f32 %v501, %v502
    %vm504 = vcmp.eq.s32.totalorder %v442, 1
    %vm505 = vcmp.eq.s32.totalorder %v443, 1
    %vm506 = vcmp.eq.s32.totalorder %v444, 1
    %vm507 = vcmp.eq.s32.totalorder %v445, 1
    %v508 = vsel %vm504, 1, 0
    %v509 = vsel %vm505, 1, 0
    %v510 = vsel %vm506, 1, 0
    %v511 = vsel %vm507, 1, 0
    %v512 = vcvt.s32.f32 %v508
    %v513 = vcvt.s32.f32 %v509
    %v514 = vcvt.s32.f32 %v510
    %v515 = vcvt.s32.f32 %v511
    %517 = vset.pattern.permute.xlu0 0
    %518 = vperm.xlu0 %517, %v512
    %v519 = vpop.permute.xlu0 %518
    %522 = vset.pattern.permute.xlu0 0
    %523 = vperm.xlu0 %522, %v513
    %v524 = vpop.permute.xlu0 %523
    %527 = vset.pattern.permute.xlu0 0
    %528 = vperm.xlu0 %527, %v514
    %v529 = vpop.permute.xlu0 %528
    %532 = vset.pattern.permute.xlu0 0
    %533 = vperm.xlu0 %532, %v515
    %v534 = vpop.permute.xlu0 %533
    %v536 = vmul.f32 %v434, %v519
    %v537 = vmul.f32 %v435, %v519
    %v538 = vmul.f32 %v436, %v524
    %v539 = vmul.f32 %v437, %v524
    %v540 = vmul.f32 %v438, %v529
    %v541 = vmul.f32 %v439, %v529
    %v542 = vmul.f32 %v440, %v534
    %v543 = vmul.f32 %v441, %v534
    %v544 = vmax.f32 %v536, %v540
    %v545 = vmax.f32 %v538, %v542
    %v546 = vmax.f32 %v544, %v545
    %v547 = vrot.slane %v546, 4
    %v548 = vmax.f32 %v546, %v547
    %v549 = vrot.slane %v548, 2
    %v550 = vmax.f32 %v548, %v549
    %v551 = vrot.slane %v550, 1
    %v552 = vmax.f32 %v550, %v551
    %v553 = vmax.f32 %v537, %v541
    %v554 = vmax.f32 %v539, %v543
    %v555 = vmax.f32 %v553, %v554
    %v556 = vrot.slane %v555, 4
    %v557 = vmax.f32 %v555, %v556
    %v558 = vrot.slane %v557, 2
    %v559 = vmax.f32 %v557, %v558
    %v560 = vrot.slane %v559, 1
    %v561 = vmax.f32 %v559, %v560
    %vm562 = vcmask 1040384
    %v563 = vsel %vm562, %v494, %v552
    %v564 = vsel %vm562, %v503, %v561
    %v565 = vpack.c.bf16 %v563, %v563
    %v566 = vpack.c.bf16 %v564, %v564
    %v567 = vld [vmem:[%s5] sm:$0xf]
    %v568 = vld [vmem:[%s5 + $0x4] sm:$0xf]
    %v569 = vld [vmem:[%s5 + $0x8] sm:$0xf]
    %v570 = vld [vmem:[%s5 + $0xc] sm:$0xf]
    %v571 = vld [vmem:[%s5 + $0x10] sm:$0xf]
    %v572 = vld [vmem:[%s5 + $0x14] sm:$0xf]
    %v573 = vld [vmem:[%s5 + $0x18] sm:$0xf]
    %v574 = vld [vmem:[%s5 + $0x1c] sm:$0xf]
    %v575 = vld [vmem:[%s5 + $0x20] sm:$0xf]
    %v576 = vld [vmem:[%s5 + $0x24] sm:$0xf]
    %v577 = vld [vmem:[%s5 + $0x28] sm:$0xf]
    %v578 = vld [vmem:[%s5 + $0x2c] sm:$0xf]
    %v579 = vld [vmem:[%s5 + $0x30] sm:$0xf]
    %v580 = vld [vmem:[%s5 + $0x34] sm:$0xf]
    %v581 = vld [vmem:[%s5 + $0x38] sm:$0xf]
    %v582 = vld [vmem:[%s5 + $0x3c] sm:$0xf]
    %v583 = vld [vmem:[%s5 + $0x40] sm:$0xf]
    %v584 = vld [vmem:[%s5 + $0x44] sm:$0xf]
    %v585 = vld [vmem:[%s5 + $0x48] sm:$0xf]
    %v586 = vld [vmem:[%s5 + $0x4c] sm:$0xf]
    %v587 = vld [vmem:[%s5 + $0x50] sm:$0xf]
    %v588 = vld [vmem:[%s5 + $0x54] sm:$0xf]
    %v589 = vld [vmem:[%s5 + $0x58] sm:$0xf]
    %v590 = vld [vmem:[%s5 + $0x5c] sm:$0xf]
    %v591 = vld [vmem:[%s5 + $0x60] sm:$0xf]
    %v592 = vld [vmem:[%s5 + $0x64] sm:$0xf]
    %v593 = vld [vmem:[%s5 + $0x68] sm:$0xf]
    %v594 = vld [vmem:[%s5 + $0x6c] sm:$0xf]
    %v595 = vld [vmem:[%s5 + $0x70] sm:$0xf]
    %v596 = vld [vmem:[%s5 + $0x74] sm:$0xf]
    %v597 = vld [vmem:[%s5 + $0x78] sm:$0xf]
    %v598 = vld [vmem:[%s5 + $0x7c] sm:$0xf]
    %v599 = vlaneseq
    %v600 = vshrl.u32 %v599, 7
    %v601 = vsub.s32 2, %v600
    %v602 = vrot.slane %v34, %v601
    %v635 = vunpack.c.l.b16 %v567
    %v636 = vunpack.c.l.b16 %v568
    %v637 = vunpack.c.l.b16 %v569
    %v638 = vunpack.c.l.b16 %v570
    %v639 = vunpack.c.l.b16 %v571
    %v640 = vunpack.c.l.b16 %v572
    %v641 = vunpack.c.l.b16 %v573
    %v642 = vunpack.c.l.b16 %v574
    %v643 = vunpack.c.l.b16 %v575
    %v644 = vunpack.c.l.b16 %v576
    %v645 = vunpack.c.l.b16 %v577
    %v646 = vunpack.c.l.b16 %v578
    %v647 = vunpack.c.l.b16 %v579
    %v648 = vunpack.c.l.b16 %v580
    %v649 = vunpack.c.l.b16 %v581
    %v650 = vunpack.c.l.b16 %v582
    %v651 = vunpack.c.l.b16 %v583
    %v652 = vunpack.c.l.b16 %v584
    %v653 = vunpack.c.l.b16 %v585
    %v654 = vunpack.c.l.b16 %v586
    %v655 = vunpack.c.l.b16 %v587
    %v656 = vunpack.c.l.b16 %v588
    %v657 = vunpack.c.l.b16 %v589
    %v658 = vunpack.c.l.b16 %v590
    %v659 = vunpack.c.l.b16 %v591
    %v660 = vunpack.c.l.b16 %v592
    %v661 = vunpack.c.l.b16 %v593
    %v662 = vunpack.c.l.b16 %v594
    %v663 = vunpack.c.l.b16 %v595
    %v664 = vunpack.c.l.b16 %v596
    %v665 = vunpack.c.l.b16 %v597
    %v666 = vunpack.c.l.b16 %v598
    %v667 = vpack.c.b16 %v636, %v635
    %v668 = vpack.c.b16 %v638, %v637
    %v669 = vpack.c.b16 %v640, %v639
    %v670 = vpack.c.b16 %v642, %v641
    %v671 = vpack.c.b16 %v644, %v643
    %v672 = vpack.c.b16 %v646, %v645
    %v673 = vpack.c.b16 %v648, %v647
    %v674 = vpack.c.b16 %v650, %v649
    %v675 = vpack.c.b16 %v652, %v651
    %v676 = vpack.c.b16 %v654, %v653
    %v677 = vpack.c.b16 %v656, %v655
    %v678 = vpack.c.b16 %v658, %v657
    %v679 = vpack.c.b16 %v660, %v659
    %v680 = vpack.c.b16 %v662, %v661
    %v681 = vpack.c.b16 %v664, %v663
    %v682 = vpack.c.b16 %v666, %v665
    %699 = vmatprep.subr.bf16.mxu0 0
    %700 = vmatpush1.bf16.msra.mxu0 %v667
    %701 = vmatprep.subr.bf16.mxu0 0
    %702 = vmatpush1.bf16.msra.mxu0 %v668
    %703 = vmatprep.subr.bf16.mxu0 0
    %704 = vmatpush1.bf16.msra.mxu0 %v669
    %705 = vmatprep.subr.bf16.mxu0 0
    %706 = vmatpush1.bf16.msra.mxu0 %v670
    %707 = vmatprep.subr.bf16.mxu0 0
    %708 = vmatpush1.bf16.msra.mxu0 %v671
    %709 = vmatprep.subr.bf16.mxu0 0
    %710 = vmatpush1.bf16.msra.mxu0 %v672
    %711 = vmatprep.subr.bf16.mxu0 0
    %712 = vmatpush1.bf16.msra.mxu0 %v673
    %713 = vmatprep.subr.bf16.mxu0 0
    %714 = vmatpush1.bf16.msra.mxu0 %v674
    %715 = vmatprep.subr.bf16.mxu0 0
    %716 = vmatpush1.bf16.msra.mxu0 %v675
    %717 = vmatprep.subr.bf16.mxu0 0
    %718 = vmatpush1.bf16.msra.mxu0 %v676
    %719 = vmatprep.subr.bf16.mxu0 0
    %720 = vmatpush1.bf16.msra.mxu0 %v677
    %721 = vmatprep.subr.bf16.mxu0 0
    %722 = vmatpush1.bf16.msra.mxu0 %v678
    %723 = vmatprep.subr.bf16.mxu0 0
    %724 = vmatpush1.bf16.msra.mxu0 %v679
    %725 = vmatprep.subr.bf16.mxu0 0
    %726 = vmatpush1.bf16.msra.mxu0 %v680
    %727 = vmatprep.subr.bf16.mxu0 0
    %728 = vmatpush1.bf16.msra.mxu0 %v681
    %729 = vmatprep.subr.bf16.mxu0 0
    %730 = vmatpush1.bf16.msra.mxu0 %v682
    %731 = vmatprep.mubr.bf16.mxu0 %v566
    %732 = vmatmul.mubr.bf16.gmra.mrb[0].mxu0 %v565
    %v733 = vpop.f32.mrb[0].mxu0
    %v734 = vadd.f32 %v602, %v733
    %v735 = vpop.f32.mrb[0].mxu0
    %v736 = vpop.f32.mrb[0].mxu0
    %v737 = vpop.f32.mrb[0].mxu0
    %738 = vdwg.mxu0
    %v739 = vmax.f32 %v734, 0.0
    %v740 = vpack.c.bf16 %v739, %v739
    %v741 = vld [vmem:[%s6] sm:$0xf]
    %v742 = vld [vmem:[%s6 + $0x4] sm:$0xf]
    %v743 = vld [vmem:[%s6 + $0x8] sm:$0xf]
    %v744 = vld [vmem:[%s6 + $0xc] sm:$0xf]
    %v745 = vld [vmem:[%s6 + $0x10] sm:$0xf]
    %v746 = vld [vmem:[%s6 + $0x14] sm:$0xf]
    %v747 = vld [vmem:[%s6 + $0x18] sm:$0xf]
    %v748 = vld [vmem:[%s6 + $0x1c] sm:$0xf]
    %v749 = vld [vmem:[%s6 + $0x20] sm:$0xf]
    %v750 = vld [vmem:[%s6 + $0x24] sm:$0xf]
    %v751 = vld [vmem:[%s6 + $0x28] sm:$0xf]
    %v752 = vld [vmem:[%s6 + $0x2c] sm:$0xf]
    %v753 = vld [vmem:[%s6 + $0x30] sm:$0xf]
    %v754 = vld [vmem:[%s6 + $0x34] sm:$0xf]
    %v755 = vld [vmem:[%s6 + $0x38] sm:$0xf]
    %v756 = vld [vmem:[%s6 + $0x3c] sm:$0xf]
    %v757 = vlaneseq
    %v758 = vshrl.u32 %v757, 7
    %v759 = vsub.s32 3, %v758
    %v760 = vrot.slane %v34, %v759
    %v777 = vunpack.c.l.b16 %v741
    %v778 = vunpack.c.l.b16 %v742
    %v779 = vunpack.c.l.b16 %v743
    %v780 = vunpack.c.l.b16 %v744
    %v781 = vunpack.c.l.b16 %v745
    %v782 = vunpack.c.l.b16 %v746
    %v783 = vunpack.c.l.b16 %v747
    %v784 = vunpack.c.l.b16 %v748
    %v785 = vunpack.c.l.b16 %v749
    %v786 = vunpack.c.l.b16 %v750
    %v787 = vunpack.c.l.b16 %v751
    %v788 = vunpack.c.l.b16 %v752
    %v789 = vunpack.c.l.b16 %v753
    %v790 = vunpack.c.l.b16 %v754
    %v791 = vunpack.c.l.b16 %v755
    %v792 = vunpack.c.l.b16 %v756
    %v793 = vpack.c.b16 %v778, %v777
    %v794 = vpack.c.b16 %v780, %v779
    %v795 = vpack.c.b16 %v782, %v781
    %v796 = vpack.c.b16 %v784, %v783
    %v797 = vpack.c.b16 %v786, %v785
    %v798 = vpack.c.b16 %v788, %v787
    %v799 = vpack.c.b16 %v790, %v789
    %v800 = vpack.c.b16 %v792, %v791
    %809 = vmatprep.subr.bf16.mxu0 0
    %810 = vmatpush1.bf16.msra.mxu0 %v793
    %811 = vmatprep.subr.bf16.mxu0 0
    %812 = vmatpush1.bf16.msra.mxu0 %v794
    %813 = vmatprep.subr.bf16.mxu0 0
    %814 = vmatpush1.bf16.msra.mxu0 %v795
    %815 = vmatprep.subr.bf16.mxu0 0
    %816 = vmatpush1.bf16.msra.mxu0 %v796
    %817 = vmatprep.subr.bf16.mxu0 0
    %818 = vmatpush1.bf16.msra.mxu0 %v797
    %819 = vmatprep.subr.bf16.mxu0 0
    %820 = vmatpush1.bf16.msra.mxu0 %v798
    %821 = vmatprep.subr.bf16.mxu0 0
    %822 = vmatpush1.bf16.msra.mxu0 %v799
    %823 = vmatprep.subr.bf16.mxu0 0
    %824 = vmatpush1.bf16.msra.mxu0 %v800
    %825 = vmatprep.subr.bf16.mxu0 0
    %826 = vmatpush1.bf16.msra.mxu0 0
    %827 = vmatprep.subr.bf16.mxu0 0
    %828 = vmatpush1.bf16.msra.mxu0 0
    %829 = vmatprep.subr.bf16.mxu0 0
    %830 = vmatpush1.bf16.msra.mxu0 0
    %831 = vmatprep.subr.bf16.mxu0 0
    %832 = vmatpush1.bf16.msra.mxu0 0
    %833 = vmatprep.subr.bf16.mxu0 0
    %834 = vmatpush1.bf16.msra.mxu0 0
    %835 = vmatprep.subr.bf16.mxu0 0
    %836 = vmatpush1.bf16.msra.mxu0 0
    %837 = vmatprep.subr.bf16.mxu0 0
    %838 = vmatpush1.bf16.msra.mxu0 0
    %839 = vmatprep.subr.bf16.mxu0 0
    %840 = vmatpush1.bf16.msra.mxu0 0
    %841 = vmatprep.mubr.bf16.mxu0 0
    %842 = vmatmul.mubr.bf16.gmra.mrb[0].mxu0 %v740
    %v843 = vpop.f32.mrb[0].mxu0
    %v844 = vadd.f32 %v760, %v843
    %v845 = vpop.f32.mrb[0].mxu0
    %v846 = vpop.f32.mrb[0].mxu0
    %v847 = vpop.f32.mrb[0].mxu0
    %848 = vdwg.mxu0
    %v849 = vmax.f32 %v844, 0.0
    %v850 = vpack.c.bf16 %v849, %v849
    %v851 = vld [vmem:[%s7] sm:$0xf]
    %v852 = vld [vmem:[%s7 + $0x4] sm:$0xf]
    %v853 = vld [vmem:[%s7 + $0x8] sm:$0xf]
    %v854 = vld [vmem:[%s7 + $0xc] sm:$0xf]
    %v855 = vld [vmem:[%s7 + $0x10] sm:$0xf]
    %v856 = vld [vmem:[%s7 + $0x14] sm:$0xf]
    %v857 = vld [vmem:[%s7 + $0x18] sm:$0xf]
    %v858 = vld [vmem:[%s7 + $0x1c] sm:$0xf]
    %v859 = vlaneseq
    %v860 = vshrl.u32 %v859, 7
    %v861 = vsub.s32 4, %v860
    %v862 = vrot.slane %v34, %v861
    %v871 = vunpack.c.l.b16 %v851
    %v872 = vunpack.c.l.b16 %v852
    %v873 = vunpack.c.l.b16 %v853
    %v874 = vunpack.c.l.b16 %v854
    %v875 = vunpack.c.l.b16 %v855
    %v876 = vunpack.c.l.b16 %v856
    %v877 = vunpack.c.l.b16 %v857
    %v878 = vunpack.c.l.b16 %v858
    %v879 = vpack.c.b16 %v872, %v871
    %v880 = vpack.c.b16 %v874, %v873
    %v881 = vpack.c.b16 %v876, %v875
    %v882 = vpack.c.b16 %v878, %v877
    %v888 = vsel %vm86, %v850, 0
    %890 = vmatprep.subr.bf16.mxu0 0
    %891 = vmatpush1.bf16.msra.mxu0 %v879
    %892 = vmatprep.subr.bf16.mxu0 0
    %893 = vmatpush1.bf16.msra.mxu0 %v880
    %894 = vmatprep.subr.bf16.mxu0 0
    %895 = vmatpush1.bf16.msra.mxu0 %v881
    %896 = vmatprep.subr.bf16.mxu0 0
    %897 = vmatpush1.bf16.msra.mxu0 %v882
    %898 = vmatprep.subr.bf16.mxu0 0
    %899 = vmatpush1.bf16.msra.mxu0 0
    %900 = vmatprep.subr.bf16.mxu0 0
    %901 = vmatpush1.bf16.msra.mxu0 0
    %902 = vmatprep.subr.bf16.mxu0 0
    %903 = vmatpush1.bf16.msra.mxu0 0
    %904 = vmatprep.subr.bf16.mxu0 0
    %905 = vmatpush1.bf16.msra.mxu0 0
    %906 = vmatprep.subr.bf16.mxu0 0
    %907 = vmatpush1.bf16.msra.mxu0 0
    %908 = vmatprep.subr.bf16.mxu0 0
    %909 = vmatpush1.bf16.msra.mxu0 0
    %910 = vmatprep.subr.bf16.mxu0 0
    %911 = vmatpush1.bf16.msra.mxu0 0
    %912 = vmatprep.subr.bf16.mxu0 0
    %913 = vmatpush1.bf16.msra.mxu0 0
    %914 = vmatprep.subr.bf16.mxu0 0
    %915 = vmatpush1.bf16.msra.mxu0 0
    %916 = vmatprep.subr.bf16.mxu0 0
    %917 = vmatpush1.bf16.msra.mxu0 0
    %918 = vmatprep.subr.bf16.mxu0 0
    %919 = vmatpush1.bf16.msra.mxu0 0
    %920 = vmatprep.subr.bf16.mxu0 0
    %921 = vmatpush1.bf16.msra.mxu0 0
    %922 = vmatprep.mubr.bf16.mxu0 0
    %923 = vmatmul.mubr.bf16.gmra.mrb[0].mxu0 %v888
    %v924 = vpop.f32.mrb[0].mxu0
    %v925 = vadd.f32 %v862, %v924
    %v926 = vpop.f32.mrb[0].mxu0
    %v927 = vpop.f32.mrb[0].mxu0
    %v928 = vpop.f32.mrb[0].mxu0
    %929 = vdwg.mxu0
    %v930 = vmul.f32 %v925, %v925
    %vm931 = vcmask 254976
    %v932 = vsel %vm931, %v930, 0.0
    %933 = vadd.xlane.f32.xlu0 %v932
    %v934 = vpop.xlane.xlu0 %933
    %v935 = vmax.f32 %v934, 1e-24
    %v936 = vrsqrt.pop %v935
    %v937 = vmul.f32 %v925, %v936
    %938 = vst.msk [vmem:[#allocation2] sm:$0x3] %vm931, %v937
    // Predicated region
    $region38: #{graphnet_forward.1} parent=1 // pred_check
      _
    $region39: #{graphnet_forward.1} parent=1 // pred_check_branch
      %940 = sbr.rel (0) target = $region41
    $region40: #{graphnet_forward.1} parent=1 // pred_region
      %s942 = ssub.s32 32, 32
      %943 = vsyncadd [#allocation3], %s942
      %s945 = sshll.u32 [#allocation2], 4
      %s946 = int_to_ptr.vmem [resolvable:$true] %s945
      %948 = dma.vmem_to_hbm [thread:$0]  %s946, 32, %s9, [#allocation3]
    $region41: #{graphnet_forward.1} parent=1 // pred_fallthru
      _
    // Predicated region
    $region42: #{graphnet_forward.1} parent=1 // pred_check
      _
    $region43: #{graphnet_forward.1} parent=1 // pred_check_branch
      %950 = sbr.rel (0) target = $region45
    $region44: #{graphnet_forward.1} parent=1 // pred_region
      %951 = dma.done [#allocation3], 32
    $region45: #{graphnet_forward.1} parent=1 // pred_fallthru
      _
    %952 = vsyncpa [#allocation3], 1

</llo_original>
